<compile_context>
chip_gen: v5e
topology: v5e:2x2
jax: 0.10.0
libtpu: 0.0.40
codegen_flags: <defaults>
</compile_context>

<pallas_src>
import functools

import jax
import jax.numpy as jnp
from jax import lax
from jax.experimental import pallas as pl
from jax.experimental.pallas import tpu as pltpu

EPS = 1e-5


# ----------------------------- tiling helpers ------------------------------

def _round_up(x, m):
    return (x + m - 1) // m * m


def _pick_block(total, cap, step=128):
    """Largest multiple of `step` that divides `total` and is <= cap (>= step)."""
    cap = max(step, min(cap, total))
    best = step
    t = step
    while t <= cap:
        if total % t == 0:
            best = t
        t += step
    return best


def _vmem_limit_bytes():
    """Per-generation scoped-VMEM budget: ~96 MiB on 128-MiB parts, ~48 MiB on v7x."""
    try:
        cap = pltpu.get_tpu_info().vmem_capacity_bytes
    except Exception:
        cap = 64 * 1024 * 1024
    return min(cap * 3 // 4, 100 * 1024 * 1024)


# ----------------------------- Pallas kernels ------------------------------

def conv_matmul_kernel(p_ref, w_ref, b_ref, o_ref, acc_ref, *, tk, num_k):
    """One (batch, spatial-tile, K-tile) step of the conv GEMM.

    p_ref  : (1, tm, tk)          bf16 im2col patches
    w_ref  : (c_out_pad, kk_pad)  bf16 weights (fully resident)
    b_ref  : (c_out_pad, 1)       f32 bias (applied once in the epilogue)
    o_ref  : (1, c_out_pad, tm)   bf16 conv output, lane dim = spatial tile
    acc_ref: (c_out_pad, tm)      f32 accumulator scratch
    """
    k = pl.program_id(2)

    @pl.when(k == 0)
    def _():
        acc_ref[...] = jnp.zeros_like(acc_ref)

    if num_k == 1:
        w_blk = w_ref[...]
    else:
        w_blk = w_ref[:, pl.ds(pl.multiple_of(k * tk, 128), tk)]

    # (c_out_pad, tk) x (tm, tk)^T -> (c_out_pad, tm), f32 accumulation on MXU
    acc_ref[...] += lax.dot_general(
        w_blk, p_ref[0],
        dimension_numbers=(((1,), (1,)), ((), ())),
        preferred_element_type=jnp.float32)

    @pl.when(k == num_k - 1)
    def _():
        o_ref[0] = (acc_ref[...] + b_ref[...]).astype(o_ref.dtype)


def ibnorm_stats_kernel(y_ref, stats_ref, *, hw, tw, need_mask):
    """IBNorm pass 1: per-(n, c) sum / sum-of-squares over one HW tile.

    y_ref    : (N, tc, tw)    bf16 conv-output tile
    stats_ref: (1, 2, N, tc)  f32 accumulator, resident across the HW grid axis
    """
    t = pl.program_id(1)

    @pl.when(t == 0)
    def _():
        stats_ref[...] = jnp.zeros_like(stats_ref)

    y = y_ref[...].astype(jnp.float32)
    if need_mask:
        lane = lax.broadcasted_iota(jnp.int32, (1, 1, tw), 2) + t * tw
        y = jnp.where(lane < hw, y, 0.0)

    stats_ref[0, 0] += jnp.sum(y, axis=2)        # (N, tc) running sum
    stats_ref[0, 1] += jnp.sum(y * y, axis=2)    # (N, tc) running sumsq


def affine_relu_kernel(y_ref, scale_ref, shift_ref, o_ref):
    """IBNorm pass 2: out = relu(conv * scale + shift); channel crop folded in.

    y_ref     : (1, c_out_pad, tw)  bf16
    scale_ref : (1, c_out, 1)       f32
    shift_ref : (1, c_out, 1)       f32
    o_ref     : (1, c_out, tw)      f32
    """
    c_out = o_ref.shape[1]
    y = y_ref[0, :c_out, :].astype(jnp.float32)
    out = y * scale_ref[0] + shift_ref[0]
    o_ref[0] = jnp.maximum(out, 0.0).astype(o_ref.dtype)


# ------------------------------ glue / wrapper ------------------------------

def _conv_out_size(size, k, stride, padding, dilation):
    return (size + 2 * padding - dilation * (k - 1) - 1) // stride + 1


def im2col_nhwc(x_bf16, k, stride, padding, dilation):
    """x: (N, C, H, W) bf16 -> patches (N, Ho*Wo, C*k*k) bf16, K ordered (c, ki, kj)."""
    n, c, h, w = x_bf16.shape
    x_nhwc = jnp.transpose(x_bf16, (0, 2, 3, 1))
    xp = jnp.pad(x_nhwc, ((0, 0), (padding, padding), (padding, padding), (0, 0)))
    h_out = _conv_out_size(h, k, stride, padding, dilation)
    w_out = _conv_out_size(w, k, stride, padding, dilation)
    cols = []
    for ki in range(k):
        for kj in range(k):
            hs, ws = ki * dilation, kj * dilation
            cols.append(xp[:, hs:hs + stride * h_out:stride,
                           ws:ws + stride * w_out:stride, :])   # (N, Ho, Wo, C)
    patches = jnp.stack(cols, axis=-1)                           # (N, Ho, Wo, C, k*k)
    return patches.reshape(n, h_out * w_out, c * k * k), h_out, w_out


@functools.partial(jax.jit,
                   static_argnames=("kernel_size", "stride", "padding", "dilation"))
def conv2d_ibnorm_relu(x, weight, bias, gamma, beta, *, kernel_size, stride=1,
                       padding=0, dilation=1):
    """x: (N, C_in, H, W); weight: (C_out, C_in, k, k); bias: (C_out,)."""
    n, c_in, _, _ = x.shape
    c_out = weight.shape[0]
    k = kernel_size
    c_bn = c_out // 2

    vmem_limit = _vmem_limit_bytes()
    work_budget = vmem_limit // 2        # conservative budget for pipelined blocks

    # ---- im2col in bf16, padded directly to TPU-friendly sizes ----
    # TODO(synk): fuse patch extraction into the conv kernel to remove this
    # k^2-expanded HBM round-trip (biggest remaining bandwidth lever).
    patches, h_out, w_out = im2col_nhwc(x.astype(jnp.bfloat16), k, stride,
                                        padding, dilation)
    hw, kk = h_out * w_out, c_in * k * k
    hw_pad = _round_up(hw, 128)
    kk_pad = _round_up(kk, 128)
    c_out_pad = _round_up(c_out, 16)     # bf16 sublane tile is 16
    patches = jnp.pad(patches, ((0, 0), (0, hw_pad - hw), (0, kk_pad - kk)))

    w2d = jnp.pad(weight.reshape(c_out, kk).astype(jnp.bfloat16),
                  ((0, c_out_pad - c_out), (0, kk_pad - kk)))
    bias2d = jnp.pad(bias.astype(jnp.float32).reshape(c_out, 1),
                     ((0, c_out_pad - c_out), (0, 0)))

    # ---- conv GEMM tiles: collapse K when it fits, budget-aware spatial tile ----
    tk = kk_pad if kk_pad <= 2048 else _pick_block(kk_pad, 2048)
    num_k = kk_pad // tk
    w_bytes = 2 * c_out_pad * kk_pad * 2                 # resident bf16 weights
    per_tm = 4 * tk + 8 * c_out_pad                      # patches + out + acc per tm
    tm_cap = max(128, (work_budget - w_bytes) // per_tm)
    tm = _pick_block(hw_pad, min(tm_cap, 2048))

    conv_out = pl.pallas_call(
        functools.partial(conv_matmul_kernel, tk=tk, num_k=num_k),
        out_shape=jax.ShapeDtypeStruct((n, c_out_pad, hw_pad), jnp.bfloat16),
        grid_spec=pltpu.PrefetchScalarGridSpec(
            num_scalar_prefetch=0,
            grid=(n, hw_pad // tm, num_k),
            in_specs=[
                pl.BlockSpec((1, tm, tk), lambda b, i, kx: (b, i, kx)),
                pl.BlockSpec((c_out_pad, kk_pad), lambda b, i, kx: (0, 0)),
                pl.BlockSpec((c_out_pad, 1), lambda b, i, kx: (0, 0)),
            ],
            out_specs=pl.BlockSpec((1, c_out_pad, tm), lambda b, i, kx: (b, 0, i)),
            scratch_shapes=[pltpu.VMEM((c_out_pad, tm), jnp.float32)],
        ),
        compiler_params=pltpu.CompilerParams(
            dimension_semantics=("parallel", "parallel", "arbitrary"),
            vmem_limit_bytes=vmem_limit),
    )(patches, w2d, bias2d)

    # ---- IBNorm pass 1: HW-tiled per-(n, c) sum / sumsq reduction ----
    tc = _pick_block(c_out_pad, 64, step=16)
    c_groups = c_out_pad // tc
    tw1_cap = max(128, work_budget // (4 * n * tc))
    tw1 = _pick_block(hw_pad, min(tw1_cap, 8192))
    need_mask = hw != hw_pad

    stats = pl.pallas_call(
        functools.partial(ibnorm_stats_kernel, hw=hw, tw=tw1, need_mask=need_mask),
        out_shape=jax.ShapeDtypeStruct((c_groups, 2, n, tc), jnp.float32),
        grid_spec=pltpu.PrefetchScalarGridSpec(
            num_scalar_prefetch=0,
            grid=(c_groups, hw_pad // tw1),
            in_specs=[pl.BlockSpec((n, tc, tw1), lambda c, t: (0, c, t))],
            out_specs=pl.BlockSpec((1, 2, n, tc), lambda c, t: (c, 0, 0, 0)),
        ),
        compiler_params=pltpu.CompilerParams(
            dimension_semantics=("parallel", "arbitrary"),
            vmem_limit_bytes=vmem_limit),
    )(conv_out)

    # ---- fold BN/IN statistics + affine into per-(n, c) scale/shift (tiny) ----
    # BN uses training-mode (biased) batch statistics, matching the reference.
    stats = jnp.transpose(stats, (1, 2, 0, 3)).reshape(2, n, c_out_pad)
    s, ss = stats[0], stats[1]
    mean_in = s / hw
    var_in = ss / hw - mean_in * mean_in
    mean_bn = jnp.sum(s, axis=0, keepdims=True) / (n * hw)
    var_bn = jnp.sum(ss, axis=0, keepdims=True) / (n * hw) - mean_bn * mean_bn
    is_bn = (jnp.arange(c_out_pad) < c_bn)[None, :]
    mean = jnp.where(is_bn, mean_bn, mean_in)
    var = jnp.maximum(jnp.where(is_bn, var_bn, var_in), 0.0)   # clamp E[x^2]-E[x]^2
    inv = lax.rsqrt(var + EPS)
    gamma_full = jnp.ones((c_out_pad,), jnp.float32).at[:c_bn].set(gamma)
    beta_full = jnp.zeros((c_out_pad,), jnp.float32).at[:c_bn].set(beta)
    scale_full = inv * gamma_full[None, :]
    shift_full = beta_full[None, :] - mean * scale_full
    scale = scale_full[:, :c_out, None]                         # (N, c_out, 1)
    shift = shift_full[:, :c_out, None]

    # ---- IBNorm pass 2: normalize + ReLU, crop folded into the out_spec ----
    per_tw2 = 4 * c_out_pad + 8 * c_out
    tw2_cap = max(128, work_budget // per_tw2)
    tw2 = _pick_block(hw_pad, min(tw2_cap, 8192))

    out = pl.pallas_call(
        affine_relu_kernel,
        out_shape=jax.ShapeDtypeStruct((n, c_out, hw), jnp.float32),
        grid_spec=pltpu.PrefetchScalarGridSpec(
            num_scalar_prefetch=0,
            grid=(n, hw_pad // tw2),
            in_specs=[
                pl.BlockSpec((1, c_out_pad, tw2), lambda b, t: (b, 0, t)),
                pl.BlockSpec((1, c_out, 1), lambda b, t: (b, 0, 0)),
                pl.BlockSpec((1, c_out, 1), lambda b, t: (b, 0, 0)),
            ],
            out_specs=pl.BlockSpec((1, c_out, tw2), lambda b, t: (b, 0, t)),
        ),
        compiler_params=pltpu.CompilerParams(
            dimension_semantics=("parallel", "parallel"),
            vmem_limit_bytes=vmem_limit),
    )(conv_out, scale, shift)

    return out.reshape(n, c_out, h_out, w_out)


# --------------------------------- main ------------------------------------

if __name__ == "__main__":
    N, C_IN, H, W = 2, 4, 16, 16
    C_OUT, K, STRIDE, PAD = 8, 3, 1, 1

    key = jax.random.PRNGKey(0)
    kx, kw, kb = jax.random.split(key, 3)

    x = jax.random.normal(kx, (N, C_IN, H, W), dtype=jnp.float32)
    weight = 0.1 * jax.random.normal(kw, (C_OUT, C_IN, K, K), dtype=jnp.float32)
    bias = 0.1 * jax.random.normal(kb, (C_OUT,), dtype=jnp.float32)
    gamma = jnp.ones((C_OUT // 2,), dtype=jnp.float32)   # BatchNorm affine init
    beta = jnp.zeros((C_OUT // 2,), dtype=jnp.float32)

    out = conv2d_ibnorm_relu(x, weight, bias, gamma, beta,
                             kernel_size=K, stride=STRIDE, padding=PAD)
    out = jax.block_until_ready(out)

    # Pure-JAX reference mirroring the kernel's dtype path (bf16 conv inputs,
    # f32 accumulation, bf16 conv intermediate, f32 normalization).
    conv_ref = lax.conv_general_dilated(
        x.astype(jnp.bfloat16), weight.astype(jnp.bfloat16),
        window_strides=(STRIDE, STRIDE),
        padding=[(PAD, PAD), (PAD, PAD)],
        dimension_numbers=("NCHW", "OIHW", "NCHW"),
        preferred_element_type=jnp.float32,
    ) + bias.reshape(1, C_OUT, 1, 1)
    conv_ref = conv_ref.astype(jnp.bfloat16).astype(jnp.float32)
    c_bn = C_OUT // 2
    bn = conv_ref[:, :c_bn]
    bn_m = bn.mean(axis=(0, 2, 3), keepdims=True)
    bn_v = ((bn - bn_m) ** 2).mean(axis=(0, 2, 3), keepdims=True)
    bn_o = (bn - bn_m) / jnp.sqrt(bn_v + EPS) * gamma.reshape(1, c_bn, 1, 1) \
        + beta.reshape(1, c_bn, 1, 1)
    inx = conv_ref[:, c_bn:]
    in_m = inx.mean(axis=(2, 3), keepdims=True)
    in_v = ((inx - in_m) ** 2).mean(axis=(2, 3), keepdims=True)
    in_o = (inx - in_m) / jnp.sqrt(in_v + EPS)
    ref = jnp.maximum(jnp.concatenate([bn_o, in_o], axis=1), 0.0)

    assert out.shape == (N, C_OUT, H, W)
    err_max = float(jnp.max(jnp.abs(out - ref)))
    err_mean = float(jnp.mean(jnp.abs(out - ref)))
    # Tolerance accounts for +/- 1 bf16 ulp on the conv intermediate (kernel GEMM
    # vs XLA conv may round differently at boundaries) divided by the channel std.
    assert err_max < 3e-2, f"max mismatch vs reference: {err_max}"
    assert err_mean < 2e-3, f"mean mismatch vs reference: {err_mean}"
    print("KERNEL_OK")
</pallas_src>

<mosaic_0001>
module attributes {stable_mosaic.version = 11 : i64} {
  func.func @conv_matmul_kernel(%arg0: i32, %arg1: i32, %arg2: i32, %arg3: memref<1x256x128xbf16, #tpu.memory_space<vmem>>, %arg4: memref<16x128xbf16, #tpu.memory_space<vmem>>, %arg5: memref<16x1xf32, #tpu.memory_space<vmem>>, %arg6: memref<1x16x256xbf16, #tpu.memory_space<vmem>>, %arg7: memref<16x256xf32, #tpu.memory_space<vmem>>) attributes {dimension_semantics = [#tpu.dimension_semantics<parallel>, #tpu.dimension_semantics<parallel>, #tpu.dimension_semantics<arbitrary>], iteration_bounds = array<i64: 2, 1, 1>, scalar_prefetch = 0 : i64, scratch_operands = 1 : i64, tpu.core_type = #tpu.core_type<tc>, window_params = [{transform_indices = @transform_0, window_bounds = array<i64: 1, 256, 128>}, {pipeline_mode = #tpu.pipeline_mode<synchronous>, transform_indices = @transform_1, window_bounds = array<i64: 16, 128>}, {pipeline_mode = #tpu.pipeline_mode<synchronous>, transform_indices = @transform_2, window_bounds = array<i64: 16, 1>}, {transform_indices = @transform_3, window_bounds = array<i64: 1, 16, 256>}]} {
    %c0_i32 = arith.constant 0 : i32
    %0 = arith.cmpi eq, %arg2, %c0_i32 : i32
    %1 = arith.extui %0 : i1 to i32
    %c0_i32_0 = arith.constant 0 : i32
    %2 = arith.cmpi ne, %1, %c0_i32_0 : i32
    scf.if %2 {
      %cst_11 = arith.constant 0.000000e+00 : f32
      %13 = vector.broadcast %cst_11 : f32 to vector<16x256xf32>
      %c0_12 = arith.constant 0 : index
      %c0_13 = arith.constant 0 : index
      %14 = vector.load %arg7[%c0_12, %c0_13] : memref<16x256xf32, #tpu.memory_space<vmem>>, vector<16x256xf32>
      tpu.vector_store %arg7[%c0_12, %c0_13], %13 {strides = array<i32>} : memref<16x256xf32, #tpu.memory_space<vmem>>, vector<16x256xf32>,
    } else {
    }
    %c0 = arith.constant 0 : index
    %c0_1 = arith.constant 0 : index
    %3 = vector.load %arg4[%c0, %c0_1] : memref<16x128xbf16, #tpu.memory_space<vmem>>, vector<16x128xbf16>
    %c0_2 = arith.constant 0 : index
    %c0_3 = arith.constant 0 : index
    %4 = vector.load %arg7[%c0_2, %c0_3] : memref<16x256xf32, #tpu.memory_space<vmem>>, vector<16x256xf32>
    %c0_4 = arith.constant 0 : index
    %c0_5 = arith.constant 0 : index
    %c0_6 = arith.constant 0 : index
    %5 = vector.load %arg3[%c0_4, %c0_5, %c0_6] : memref<1x256x128xbf16, #tpu.memory_space<vmem>>, vector<1x256x128xbf16>
    %6 = vector.shape_cast %5 : vector<1x256x128xbf16> to vector<256x128xbf16>
    %cst = arith.constant dense<0.000000e+00> : vector<16x256xf32>
    %7 = tpu.matmul %3, %6, %cst {dimension_numbers = #tpu.dot_dimension_numbers<[1], [1], [0], [0], [0, 0, 1, 0], [], []>} : vector<16x128xbf16>, vector<256x128xbf16>, vector<16x256xf32> -> vector<16x256xf32>
    %8 = arith.addf %4, %7 : vector<16x256xf32>
    %c0_7 = arith.constant 0 : index
    %c0_8 = arith.constant 0 : index
    %9 = vector.load %arg7[%c0_7, %c0_8] : memref<16x256xf32, #tpu.memory_space<vmem>>, vector<16x256xf32>
    tpu.vector_store %arg7[%c0_7, %c0_8], %8 {strides = array<i32>} : memref<16x256xf32, #tpu.memory_space<vmem>>, vector<16x256xf32>,
    %c0_i32_9 = arith.constant 0 : i32
    %10 = arith.cmpi eq, %arg2, %c0_i32_9 : i32
    %11 = arith.extui %10 : i1 to i32
    %c0_i32_10 = arith.constant 0 : i32
    %12 = arith.cmpi ne, %11, %c0_i32_10 : i32
    scf.if %12 {
      %c0_11 = arith.constant 0 : index
      %c0_12 = arith.constant 0 : index
      %13 = vector.load %arg7[%c0_11, %c0_12] : memref<16x256xf32, #tpu.memory_space<vmem>>, vector<16x256xf32>
      %c0_13 = arith.constant 0 : index
      %c0_14 = arith.constant 0 : index
      %14 = vector.load %arg5[%c0_13, %c0_14] : memref<16x1xf32, #tpu.memory_space<vmem>>, vector<16x1xf32>
      %15 = vector.broadcast %14 : vector<16x1xf32> to vector<16x256xf32>
      %16 = arith.addf %13, %15 : vector<16x256xf32>
      %17 = arith.truncf %16 : vector<16x256xf32> to vector<16x256xbf16>
      %c0_15 = arith.constant 0 : index
      %c0_16 = arith.constant 0 : index
      %c0_17 = arith.constant 0 : index
      %18 = vector.load %arg6[%c0_15, %c0_16, %c0_17] : memref<1x16x256xbf16, #tpu.memory_space<vmem>>, vector<1x16x256xbf16>
      %19 = vector.shape_cast %18 : vector<1x16x256xbf16> to vector<16x256xbf16>
      %20 = vector.shape_cast %17 : vector<16x256xbf16> to vector<1x16x256xbf16>
      tpu.vector_store %arg6[%c0_15, %c0_16, %c0_17], %20 {strides = array<i32>} : memref<1x16x256xbf16, #tpu.memory_space<vmem>>, vector<1x16x256xbf16>,
    } else {
    }
    return
  }
  func.func @transform_0(%arg0: i32, %arg1: i32, %arg2: i32) -> (i32, i32, i32) {
    %c0_i32 = arith.constant 0 : i32
    return %arg0, %arg1, %arg2 : i32, i32, i32
  }
  func.func @transform_1(%arg0: i32, %arg1: i32, %arg2: i32) -> (i32, i32) {
    %c0_i32 = arith.constant 0 : i32
    %c0_i32_0 = arith.constant 0 : i32
    %c0_i32_1 = arith.constant 0 : i32
    return %c0_i32, %c0_i32_0 : i32, i32
  }
  func.func @transform_2(%arg0: i32, %arg1: i32, %arg2: i32) -> (i32, i32) {
    %c0_i32 = arith.constant 0 : i32
    %c0_i32_0 = arith.constant 0 : i32
    %c0_i32_1 = arith.constant 0 : i32
    return %c0_i32, %c0_i32_0 : i32, i32
  }
  func.func @transform_3(%arg0: i32, %arg1: i32, %arg2: i32) -> (i32, i32, i32) {
    %c0_i32 = arith.constant 0 : i32
    %c0_i32_0 = arith.constant 0 : i32
    return %arg0, %c0_i32, %arg1 : i32, i32, i32
  }
}

module attributes {stable_mosaic.version = 11 : i64} {
  func.func @ibnorm_stats_kernel(%arg0: i32, %arg1: i32, %arg2: memref<2x16x256xbf16, #tpu.memory_space<vmem>>, %arg3: memref<1x2x2x16xf32, #tpu.memory_space<vmem>>) attributes {dimension_semantics = [#tpu.dimension_semantics<parallel>, #tpu.dimension_semantics<arbitrary>], iteration_bounds = array<i64: 1, 1>, scalar_prefetch = 0 : i64, scratch_operands = 0 : i64, tpu.core_type = #tpu.core_type<tc>, window_params = [{transform_indices = @transform_0, window_bounds = array<i64: 2, 16, 256>}, {transform_indices = @transform_1, window_bounds = array<i64: 1, 2, 2, 16>}]} {
    %c0_i32 = arith.constant 0 : i32
    %0 = arith.cmpi eq, %arg1, %c0_i32 : i32
    %1 = arith.extui %0 : i1 to i32
    %c0_i32_0 = arith.constant 0 : i32
    %2 = arith.cmpi ne, %1, %c0_i32_0 : i32
    scf.if %2 {
      %cst_19 = arith.constant 0.000000e+00 : f32
      %20 = vector.broadcast %cst_19 : f32 to vector<1x2x2x16xf32>
      %c0_20 = arith.constant 0 : index
      %c0_21 = arith.constant 0 : index
      %c0_22 = arith.constant 0 : index
      %c0_23 = arith.constant 0 : index
      %21 = vector.load %arg3[%c0_20, %c0_21, %c0_22, %c0_23] : memref<1x2x2x16xf32, #tpu.memory_space<vmem>>, vector<1x2x2x16xf32>
      tpu.vector_store %arg3[%c0_20, %c0_21, %c0_22, %c0_23], %20 {strides = array<i32>} : memref<1x2x2x16xf32, #tpu.memory_space<vmem>>, vector<1x2x2x16xf32>,
    } else {
    }
    %c0 = arith.constant 0 : index
    %c0_1 = arith.constant 0 : index
    %c0_2 = arith.constant 0 : index
    %3 = vector.load %arg2[%c0, %c0_1, %c0_2] : memref<2x16x256xbf16, #tpu.memory_space<vmem>>, vector<2x16x256xbf16>
    %4 = arith.extf %3 : vector<2x16x256xbf16> to vector<2x16x256xf32>
    %c0_3 = arith.constant 0 : index
    %c0_4 = arith.constant 0 : index
    %c0_5 = arith.constant 0 : index
    %c0_6 = arith.constant 0 : index
    %5 = vector.load %arg3[%c0_3, %c0_4, %c0_5, %c0_6] : memref<1x2x2x16xf32, #tpu.memory_space<vmem>>, vector<1x1x2x16xf32>
    %6 = vector.shape_cast %5 : vector<1x1x2x16xf32> to vector<2x16xf32>
    %cst = arith.constant dense<0.000000e+00> : vector<2x16xf32>
    %7 = vector.multi_reduction <add>, %4, %cst [2] : vector<2x16x256xf32> to vector<2x16xf32>
    %8 = arith.addf %6, %7 : vector<2x16xf32>
    %c0_7 = arith.constant 0 : index
    %c0_8 = arith.constant 0 : index
    %c0_9 = arith.constant 0 : index
    %c0_10 = arith.constant 0 : index
    %9 = vector.load %arg3[%c0_7, %c0_8, %c0_9, %c0_10] : memref<1x2x2x16xf32, #tpu.memory_space<vmem>>, vector<1x1x2x16xf32>
    %10 = vector.shape_cast %9 : vector<1x1x2x16xf32> to vector<2x16xf32>
    %11 = vector.shape_cast %8 : vector<2x16xf32> to vector<1x1x2x16xf32>
    tpu.vector_store %arg3[%c0_7, %c0_8, %c0_9, %c0_10], %11 {strides = array<i32>} : memref<1x2x2x16xf32, #tpu.memory_space<vmem>>, vector<1x1x2x16xf32>,
    %c0_11 = arith.constant 0 : index
    %c1 = arith.constant 1 : index
    %c0_12 = arith.constant 0 : index
    %c0_13 = arith.constant 0 : index
    %12 = vector.load %arg3[%c0_11, %c1, %c0_12, %c0_13] : memref<1x2x2x16xf32, #tpu.memory_space<vmem>>, vector<1x1x2x16xf32>
    %13 = vector.shape_cast %12 : vector<1x1x2x16xf32> to vector<2x16xf32>
    %14 = arith.mulf %4, %4 : vector<2x16x256xf32>
    %cst_14 = arith.constant dense<0.000000e+00> : vector<2x16xf32>
    %15 = vector.multi_reduction <add>, %14, %cst_14 [2] : vector<2x16x256xf32> to vector<2x16xf32>
    %16 = arith.addf %13, %15 : vector<2x16xf32>
    %c0_15 = arith.constant 0 : index
    %c1_16 = arith.constant 1 : index
    %c0_17 = arith.constant 0 : index
    %c0_18 = arith.constant 0 : index
    %17 = vector.load %arg3[%c0_15, %c1_16, %c0_17, %c0_18] : memref<1x2x2x16xf32, #tpu.memory_space<vmem>>, vector<1x1x2x16xf32>
    %18 = vector.shape_cast %17 : vector<1x1x2x16xf32> to vector<2x16xf32>
    %19 = vector.shape_cast %16 : vector<2x16xf32> to vector<1x1x2x16xf32>
    tpu.vector_store %arg3[%c0_15, %c1_16, %c0_17, %c0_18], %19 {strides = array<i32>} : memref<1x2x2x16xf32, #tpu.memory_space<vmem>>, vector<1x1x2x16xf32>,
    return
  }
  func.func @transform_0(%arg0: i32, %arg1: i32) -> (i32, i32, i32) {
    %c0_i32 = arith.constant 0 : i32
    %c0_i32_0 = arith.constant 0 : i32
    return %c0_i32, %arg0, %arg1 : i32, i32, i32
  }
  func.func @transform_1(%arg0: i32, %arg1: i32) -> (i32, i32, i32, i32) {
    %c0_i32 = arith.constant 0 : i32
    %c0_i32_0 = arith.constant 0 : i32
    %c0_i32_1 = arith.constant 0 : i32
    %c0_i32_2 = arith.constant 0 : i32
    return %arg0, %c0_i32, %c0_i32_0, %c0_i32_1 : i32, i32, i32, i32
  }
}

module attributes {stable_mosaic.version = 11 : i64} {
  func.func @affine_relu_kernel(%arg0: i32, %arg1: i32, %arg2: memref<1x16x256xbf16, #tpu.memory_space<vmem>>, %arg3: memref<1x8x1xf32, #tpu.memory_space<vmem>>, %arg4: memref<1x8x1xf32, #tpu.memory_space<vmem>>, %arg5: memref<1x8x256xf32, #tpu.memory_space<vmem>>) attributes {dimension_semantics = [#tpu.dimension_semantics<parallel>, #tpu.dimension_semantics<parallel>], iteration_bounds = array<i64: 2, 1>, scalar_prefetch = 0 : i64, scratch_operands = 0 : i64, tpu.core_type = #tpu.core_type<tc>, window_params = [{transform_indices = @transform_0, window_bounds = array<i64: 1, 16, 256>}, {transform_indices = @transform_1, window_bounds = array<i64: 1, 8, 1>}, {transform_indices = @transform_2, window_bounds = array<i64: 1, 8, 1>}, {transform_indices = @transform_3, window_bounds = array<i64: 1, 8, 256>}]} {
    %c0 = arith.constant 0 : index
    %c0_0 = arith.constant 0 : index
    %c0_1 = arith.constant 0 : index
    %0 = vector.load %arg2[%c0, %c0_0, %c0_1] : memref<1x16x256xbf16, #tpu.memory_space<vmem>>, vector<1x8x256xbf16>
    %1 = vector.shape_cast %0 : vector<1x8x256xbf16> to vector<8x256xbf16>
    %2 = arith.extf %1 : vector<8x256xbf16> to vector<8x256xf32>
    %c0_2 = arith.constant 0 : index
    %c0_3 = arith.constant 0 : index
    %c0_4 = arith.constant 0 : index
    %3 = vector.load %arg3[%c0_2, %c0_3, %c0_4] : memref<1x8x1xf32, #tpu.memory_space<vmem>>, vector<1x8x1xf32>
    %4 = vector.shape_cast %3 : vector<1x8x1xf32> to vector<8x1xf32>
    %5 = vector.broadcast %4 : vector<8x1xf32> to vector<8x256xf32>
    %6 = arith.mulf %2, %5 : vector<8x256xf32>
    %c0_5 = arith.constant 0 : index
    %c0_6 = arith.constant 0 : index
    %c0_7 = arith.constant 0 : index
    %7 = vector.load %arg4[%c0_5, %c0_6, %c0_7] : memref<1x8x1xf32, #tpu.memory_space<vmem>>, vector<1x8x1xf32>
    %8 = vector.shape_cast %7 : vector<1x8x1xf32> to vector<8x1xf32>
    %9 = vector.broadcast %8 : vector<8x1xf32> to vector<8x256xf32>
    %10 = arith.addf %6, %9 : vector<8x256xf32>
    %cst = arith.constant 0.000000e+00 : f32
    %11 = vector.broadcast %cst : f32 to vector<8x256xf32>
    %12 = arith.maximumf %10, %11 : vector<8x256xf32>
    %c0_8 = arith.constant 0 : index
    %c0_9 = arith.constant 0 : index
    %c0_10 = arith.constant 0 : index
    %13 = vector.load %arg5[%c0_8, %c0_9, %c0_10] : memref<1x8x256xf32, #tpu.memory_space<vmem>>, vector<1x8x256xf32>
    %14 = vector.shape_cast %13 : vector<1x8x256xf32> to vector<8x256xf32>
    %15 = vector.shape_cast %12 : vector<8x256xf32> to vector<1x8x256xf32>
    tpu.vector_store %arg5[%c0_8, %c0_9, %c0_10], %15 {strides = array<i32>} : memref<1x8x256xf32, #tpu.memory_space<vmem>>, vector<1x8x256xf32>,
    return
  }
  func.func @transform_0(%arg0: i32, %arg1: i32) -> (i32, i32, i32) {
    %c0_i32 = arith.constant 0 : i32
    %c0_i32_0 = arith.constant 0 : i32
    return %arg0, %c0_i32, %arg1 : i32, i32, i32
  }
  func.func @transform_1(%arg0: i32, %arg1: i32) -> (i32, i32, i32) {
    %c0_i32 = arith.constant 0 : i32
    %c0_i32_0 = arith.constant 0 : i32
    %c0_i32_1 = arith.constant 0 : i32
    return %arg0, %c0_i32, %c0_i32_0 : i32, i32, i32
  }
  func.func @transform_2(%arg0: i32, %arg1: i32) -> (i32, i32, i32) {
    %c0_i32 = arith.constant 0 : i32
    %c0_i32_0 = arith.constant 0 : i32
    %c0_i32_1 = arith.constant 0 : i32
    return %arg0, %c0_i32, %c0_i32_0 : i32, i32, i32
  }
  func.func @transform_3(%arg0: i32, %arg1: i32) -> (i32, i32, i32) {
    %c0_i32 = arith.constant 0 : i32
    %c0_i32_0 = arith.constant 0 : i32
    return %arg0, %c0_i32, %arg1 : i32, i32, i32
  }
}

</mosaic_0001>

<llo_original>
// kernel: conv2d_ibnorm_relu.4
$region0: #{conv2d_ibnorm_relu.4}
  #allocation0 [shape = 'u32[]', space=smem, size = 0x4, offset = 0x4, fixed_abs, tag = 'smem constant byte address 0x4 - core index']
  #allocation1 [shape = 'u32[72,128]{1,0:T(1,128)}', space=vmem, size = 0x9000, scoped, tag = 'internal scratch']
  %s0 = inlined_call_operand.vmem [shape: bf16[2,16,256], index: 0, kind: input, shape index: {}]
  %s1 = inlined_call_operand.vmem [shape: f32[1,2,2,16], index: 1, kind: output, shape index: {}]
  %s2 = sld [smem:[#allocation0]]
  $region18: #{conv2d_ibnorm_relu.4} parent=0
    _
  %s4 = ssub.s32 1, %s2
  %s5 = scalar_select 0, %s4, %s2
  // Predicated region
  $region2: #{conv2d_ibnorm_relu.4} parent=0 // pred_check
    _
  $region3: #{conv2d_ibnorm_relu.4} parent=0 // pred_check_branch
    %7 = sbr.rel (0) target = $region5
  $region4: #{conv2d_ibnorm_relu.4} parent=0 // pred_region
    _
  $region5: #{conv2d_ibnorm_relu.4} parent=0 // pred_fallthru
    _
  %p8 = scmp.eq.s32.totalorder 0, 0
  // Predicated region
  $region6: #{conv2d_ibnorm_relu.4} parent=0 // pred_check
    %p9 = pneg %p8
  $region7: #{conv2d_ibnorm_relu.4} parent=0 // pred_check_branch
    %11 = sbr.rel (%p9) target = $region9
  $region8: #{conv2d_ibnorm_relu.4} parent=0 // pred_region
    %vm12 = vcmask 123904
    %13 = vst.msk [vmem:[%s1] sm:$0x3] %vm12, 0.0
    %14 = vst.msk [vmem:[%s1 + $0x2] sm:$0x3] %vm12, 0.0
  $region9: #{conv2d_ibnorm_relu.4} parent=0 // pred_fallthru
    _
  %v15 = vld [vmem:[%s0] sm:$0xff]
  %v16 = vld [vmem:[%s0 + $0x8] sm:$0xff]
  %v17 = vld [vmem:[%s0 + $0x10] sm:$0xff]
  %v18 = vld [vmem:[%s0 + $0x18] sm:$0xff]
  %v19 = vunpack.c.l.bf16 %v15
  %v20 = vunpack.c.h.bf16 %v15
  %v21 = vunpack.c.l.bf16 %v16
  %v22 = vunpack.c.h.bf16 %v16
  %v23 = vunpack.c.l.bf16 %v17
  %v24 = vunpack.c.h.bf16 %v17
  %v25 = vunpack.c.l.bf16 %v18
  %v26 = vunpack.c.h.bf16 %v18
  %v27 = vld [vmem:[%s1] sm:$0x3]
  %v28 = vadd.f32 %v19, %v20
  %29 = vadd.xlane.f32.xlu0 %v28
  %v30 = vpop.xlane.xlu0 %29
  %v31 = vadd.f32 %v21, %v22
  %32 = vadd.xlane.f32.xlu0 %v31
  %v33 = vpop.xlane.xlu0 %32
  %v34 = vadd.f32 %v23, %v24
  %35 = vadd.xlane.f32.xlu0 %v34
  %v36 = vpop.xlane.xlu0 %35
  %v37 = vadd.f32 %v25, %v26
  %38 = vadd.xlane.f32.xlu0 %v37
  %v39 = vpop.xlane.xlu0 %38
  %v44 = vlaneseq
  %v45 = vand.u32 %v44, 127
  %v46 = vperm.slane %v30, %v45
  %v47 = vadd.s32 %v45, 4294967288
  %v48 = vperm.slane %v33, %v47
  %vm49 = vcmask 130112
  %v50 = vsel %vm49, %v48, %v46
  %v51 = vperm.slane %v36, %v45
  %v52 = vperm.slane %v39, %v47
  %v53 = vsel %vm49, %v52, %v51
  %vm54 = vcmask 1041409
  %v55 = vsel %vm54, %v53, %v50
  %v57 = vadd.f32 %v27, %v55
  %vm58 = vcmask 123904
  %59 = vst.msk [vmem:[%s1] sm:$0x3] %vm58, %v57
  %s60 = scalar_lea.vmem %s1, 2
  %v61 = vld [vmem:[%s60] sm:$0x3]
  %v62 = vmul.f32 %v19, %v19
  %v63 = vmul.f32 %v20, %v20
  %v64 = vmul.f32 %v21, %v21
  %v65 = vmul.f32 %v22, %v22
  %v66 = vmul.f32 %v23, %v23
  %v67 = vmul.f32 %v24, %v24
  %v68 = vmul.f32 %v25, %v25
  %v69 = vmul.f32 %v26, %v26
  %v70 = vadd.f32 %v62, %v63
  %71 = vadd.xlane.f32.xlu0 %v70
  %v72 = vpop.xlane.xlu0 %71
  %v73 = vadd.f32 %v64, %v65
  %74 = vadd.xlane.f32.xlu0 %v73
  %v75 = vpop.xlane.xlu0 %74
  %v76 = vadd.f32 %v66, %v67
  %77 = vadd.xlane.f32.xlu0 %v76
  %v78 = vpop.xlane.xlu0 %77
  %v79 = vadd.f32 %v68, %v69
  %80 = vadd.xlane.f32.xlu0 %v79
  %v81 = vpop.xlane.xlu0 %80
  %v86 = vperm.slane %v72, %v45
  %v87 = vperm.slane %v75, %v47
  %v88 = vsel %vm49, %v87, %v86
  %v89 = vperm.slane %v78, %v45
  %v90 = vperm.slane %v81, %v47
  %v91 = vsel %vm49, %v90, %v89
  %v92 = vsel %vm54, %v91, %v88
  %v94 = vadd.f32 %v61, %v92
  %95 = vst.msk [vmem:[%s60] sm:$0x3] %vm58, %v94
  // Predicated region
  $region10: #{conv2d_ibnorm_relu.4} parent=0 // pred_check
    _
  $region11: #{conv2d_ibnorm_relu.4} parent=0 // pred_check_branch
    %97 = sbr.rel (0) target = $region13
  $region12: #{conv2d_ibnorm_relu.4} parent=0 // pred_region
    _
  $region13: #{conv2d_ibnorm_relu.4} parent=0 // pred_fallthru
    _
  // Predicated region
  $region14: #{conv2d_ibnorm_relu.4} parent=0 // pred_check
    _
  $region15: #{conv2d_ibnorm_relu.4} parent=0 // pred_check_branch
    %99 = sbr.rel (0) target = $region17
  $region16: #{conv2d_ibnorm_relu.4} parent=0 // pred_region
    _
  $region17: #{conv2d_ibnorm_relu.4} parent=0 // pred_fallthru
    _

// kernel: conv2d_ibnorm_relu.3
$region0: #{conv2d_ibnorm_relu.3}
  #allocation0 [shape = 'u32[]', space=smem, size = 0x4, offset = 0x4, fixed_abs, tag = 'smem constant byte address 0x4 - core index']
  #allocation1 [shape = 'u32[72,128]{1,0:T(1,128)}', space=vmem, size = 0x9000, scoped, tag = 'internal scratch']
  #allocation2 [shape = 'f32[16,256]{1,0:T(8,128)}', space=vmem, size = 0x4000, scoped, tag = 'scratch operand']
  %s0 = inlined_call_operand.vmem [shape: bf16[2,256,128], index: 0, kind: input, shape index: {}]
  %s1 = inlined_call_operand.vmem [shape: bf16[16,128], index: 1, kind: input, shape index: {}]
  %s2 = inlined_call_operand.vmem [shape: f32[16,1], index: 2, kind: input, shape index: {}]
  %s3 = inlined_call_operand.vmem [shape: bf16[2,16,256], index: 3, kind: output, shape index: {}]
  %s4 = sld [smem:[#allocation0]]
  $region53: #{conv2d_ibnorm_relu.3} parent=0
    _
  %s6 = ssub.s32 1, %s4
  %s7 = scalar_select 0, %s6, %s4
  loop: start=0, step=1, limit=4
  $region2: #{conv2d_ibnorm_relu.3} parent=0 // loop_pre_header
    _
  $region3: #{conv2d_ibnorm_relu.3} parent=0 // loop_header
    %s9 = sphi 0, %s13
    %p10 = scmp.ge.s32.totalorder %s9, 4
    %s16 = sphi 0, %s35
    %s17 = sphi 0, %s31
    %s18 = sphi 0, %s27
    %s19 = sphi 0, %s16
    %s20 = sphi 0, %s17
    %s21 = sphi 0, %s18
    %s22 = sphi 0, %s19
    %s23 = sphi 0, %s20
    %s24 = sphi 0, %s21
    %s42 = sphi 0, %s44
    %s45 = sphi 0, %s42
    %s46 = sphi 0, %s45
    %s62 = sphi 0, %s46
    %s66 = sphi 0, %s66
    %s68 = sphi 0, %s66
    %s69 = sphi 0, %s68
    %s83 = sphi 0, %s69
    %s87 = sphi 0, %s87
    %s89 = sphi 0, %s87
    %s90 = sphi 0, %s89
    %s104 = sphi 0, %s90
    %s112 = sphi 0, %s114
    %s115 = sphi 0, %s112
    %s116 = sphi 0, %s115
    %s132 = sphi 0, %s116
  $region4: #{conv2d_ibnorm_relu.3} parent=0 // loop_header_branch
    %12 = sbr.rel (%p10) target = $region8
  $region5: #{conv2d_ibnorm_relu.3} parent=0 // loop_body
    %s14 = ssub.s32 %s9, 1
    %s15 = ssub.s32 %s9, 2
    %s25 = sadd.s32 1, %s18
    %p26 = scmp.ge.s32.totalorder %s25, 1
    %s27 = scalar_select %p26, 0, %s25
    %s28 = sadd.s32 1, %s17
    %s29 = scalar_select %p26, %s28, %s17
    %p30 = scmp.ge.s32.totalorder %s29, 1
    %s31 = scalar_select %p30, 0, %s29
    %s32 = sadd.s32 1, %s16
    %s33 = scalar_select %p30, %s32, %s16
    %p34 = scmp.ge.s32.totalorder %s33, 2
    %s35 = scalar_select %p34, 0, %s33
    %s36 = ssub.s32 %s16, %s35
    %s37 = ssub.s32 %s17, %s31
    %s38 = sor.u32 %s36, %s37
    %s39 = ssub.s32 %s18, %s27
    %s40 = sor.u32 %s38, %s39
    %p41 = scmp.eq.s32.totalorder %s40, 0
    %s43 = sadd.s32 %s42, 1
    %s44 = scalar_select %p41, %s42, %s43
    %p47 = pneg %p41
    %p48 = scmp.eq.s32.totalorder %s9, 1
    %p49 = por %p47, %p48
    %p50 = scmp.ne.s32.totalorder %s42, %s45
    %p51 = scmp.eq.s32.totalorder %s9, 0
    %p52 = por %p50, %p51
    %p53 = scmp.ne.s32.totalorder %s42, %s45
    %p54 = scmp.eq.s32.totalorder %s14, 1
    %p55 = por %p53, %p54
    %p56 = scmp.ne.s32.totalorder %s45, %s46
    %p57 = scmp.eq.s32.totalorder %s14, 0
    %p58 = por %p56, %p57
    %p59 = scmp.ne.s32.totalorder %s45, %s46
    %p60 = scmp.eq.s32.totalorder %s15, 1
    %p61 = por %p59, %p60
    %p63 = scmp.ne.s32.totalorder %s46, %s62
    %p64 = scmp.eq.s32.totalorder %s15, 0
    %p65 = por %p63, %p64
    %s67 = sadd.s32 %s66, 1
    %p70 = scmp.eq.s32.totalorder %s9, 1
    %p71 = scmp.ne.s32.totalorder %s66, %s68
    %p72 = scmp.eq.s32.totalorder %s9, 0
    %p73 = por %p71, %p72
    %p74 = scmp.ne.s32.totalorder %s66, %s68
    %p75 = scmp.eq.s32.totalorder %s14, 1
    %p76 = por %p74, %p75
    %p77 = scmp.ne.s32.totalorder %s68, %s69
    %p78 = scmp.eq.s32.totalorder %s14, 0
    %p79 = por %p77, %p78
    %p80 = scmp.ne.s32.totalorder %s68, %s69
    %p81 = scmp.eq.s32.totalorder %s15, 1
    %p82 = por %p80, %p81
    %p84 = scmp.ne.s32.totalorder %s69, %s83
    %p85 = scmp.eq.s32.totalorder %s15, 0
    %p86 = por %p84, %p85
    %s88 = sadd.s32 %s87, 1
    %p91 = scmp.eq.s32.totalorder %s9, 1
    %p92 = scmp.ne.s32.totalorder %s87, %s89
    %p93 = scmp.eq.s32.totalorder %s9, 0
    %p94 = por %p92, %p93
    %p95 = scmp.ne.s32.totalorder %s87, %s89
    %p96 = scmp.eq.s32.totalorder %s14, 1
    %p97 = por %p95, %p96
    %p98 = scmp.ne.s32.totalorder %s89, %s90
    %p99 = scmp.eq.s32.totalorder %s14, 0
    %p100 = por %p98, %p99
    %p101 = scmp.ne.s32.totalorder %s89, %s90
    %p102 = scmp.eq.s32.totalorder %s15, 1
    %p103 = por %p101, %p102
    %p105 = scmp.ne.s32.totalorder %s90, %s104
    %p106 = scmp.eq.s32.totalorder %s15, 0
    %p107 = por %p105, %p106
    %s108 = ssub.s32 %s16, %s35
    %s109 = ssub.s32 %s17, %s31
    %s110 = sor.u32 %s108, %s109
    %p111 = scmp.eq.s32.totalorder %s110, 0
    %s113 = sadd.s32 %s112, 1
    %s114 = scalar_select %p111, %s112, %s113
    %p117 = pneg %p111
    %p118 = scmp.eq.s32.totalorder %s9, 1
    %p119 = por %p117, %p118
    %p120 = scmp.ne.s32.totalorder %s112, %s115
    %p121 = scmp.eq.s32.totalorder %s9, 0
    %p122 = por %p120, %p121
    %p123 = scmp.ne.s32.totalorder %s112, %s115
    %p124 = scmp.eq.s32.totalorder %s14, 1
    %p125 = por %p123, %p124
    %p126 = scmp.ne.s32.totalorder %s115, %s116
    %p127 = scmp.eq.s32.totalorder %s14, 0
    %p128 = por %p126, %p127
    %p129 = scmp.ne.s32.totalorder %s115, %s116
    %p130 = scmp.eq.s32.totalorder %s15, 1
    %p131 = por %p129, %p130
    %p133 = scmp.ne.s32.totalorder %s116, %s132
    %p134 = scmp.eq.s32.totalorder %s15, 0
    %p135 = por %p133, %p134
    %p136 = scmp.le.s32.totalorder 1, %s9
    %p137 = scmp.lt.s32.totalorder %s9, 3
    %p138 = pnand %p136, %p137
    %p139 = pneg %p138
    // Predicated region
    $region9: #{conv2d_ibnorm_relu.3} parent=5 // pred_check
      _
    $region10: #{conv2d_ibnorm_relu.3} parent=5 // pred_check_branch
      %141 = sbr.rel (%p138) target = $region12
    $region11: #{conv2d_ibnorm_relu.3} parent=5 // pred_region
      %s142 = ssub.s32 %s9, 1
      // Predicated region
      $region13: #{conv2d_ibnorm_relu.3} parent=11 // pred_check
        %p143 = pneg %p79
      $region14: #{conv2d_ibnorm_relu.3} parent=11 // pred_check_branch
        %145 = sbr.rel (%p143) target = $region16
      $region15: #{conv2d_ibnorm_relu.3} parent=11 // pred_region
        _
      $region16: #{conv2d_ibnorm_relu.3} parent=11 // pred_fallthru
        _
      // Predicated region
      $region17: #{conv2d_ibnorm_relu.3} parent=11 // pred_check
        %p146 = pneg %p100
      $region18: #{conv2d_ibnorm_relu.3} parent=11 // pred_check_branch
        %148 = sbr.rel (%p146) target = $region20
      $region19: #{conv2d_ibnorm_relu.3} parent=11 // pred_region
        _
      $region20: #{conv2d_ibnorm_relu.3} parent=11 // pred_fallthru
        _
    $region12: #{conv2d_ibnorm_relu.3} parent=5 // pred_fallthru
      _
    %p149 = scmp.lt.s32.totalorder %s9, 2
    // Predicated region
    $region21: #{conv2d_ibnorm_relu.3} parent=5 // pred_check
      %p150 = pneg %p149
    $region22: #{conv2d_ibnorm_relu.3} parent=5 // pred_check_branch
      %152 = sbr.rel (%p150) target = $region24
    $region23: #{conv2d_ibnorm_relu.3} parent=5 // pred_region
      // Predicated region
      $region25: #{conv2d_ibnorm_relu.3} parent=23 // pred_check
        %p153 = pneg %p52
      $region26: #{conv2d_ibnorm_relu.3} parent=23 // pred_check_branch
        %155 = sbr.rel (%p153) target = $region28
      $region27: #{conv2d_ibnorm_relu.3} parent=23 // pred_region
        %s156 = smul.u32 32, %s17
        %p157 = scmp.lt.s32.totalorder %s16, 1
        %s158 = scalar_select %p157, %s16, 1
        %p159 = scmp.lt.s32.totalorder %s156, 31
        %s160 = scalar_select %p159, %s156, 31
        %p161 = scmp.lt.s32.totalorder %s18, 0
        %s162 = scalar_select %p161, %s18, 0
        %s163 = sadd.s32 %s162, %s160
        %s164 = smul.addr %s158, 32
        %s165 = sadd.s32 %s163, %s164
        %s166 = smul.addr %s165, 4
        %s167 = scalar_lea.vmem %s0, %s166
        %s168 = smul.u32 32, %s17
      $region28: #{conv2d_ibnorm_relu.3} parent=23 // pred_fallthru
        _
    $region24: #{conv2d_ibnorm_relu.3} parent=5 // pred_fallthru
      _
    %p169 = scmp.le.s32.totalorder 1, %s9
    %p170 = scmp.lt.s32.totalorder %s9, 3
    %p171 = pnand %p169, %p170
    %p172 = pneg %p171
    // Predicated region
    $region29: #{conv2d_ibnorm_relu.3} parent=5 // pred_check
      _
    $region30: #{conv2d_ibnorm_relu.3} parent=5 // pred_check_branch
      %174 = sbr.rel (%p171) target = $region32
    $region31: #{conv2d_ibnorm_relu.3} parent=5 // pred_region
      %s175 = ssub.s32 %s9, 1
      %s176 = smul.u32 32, %s20
      %p177 = scmp.lt.s32.totalorder %s19, 1
      %s178 = scalar_select %p177, %s19, 1
      %p179 = scmp.lt.s32.totalorder %s176, 31
      %s180 = scalar_select %p179, %s176, 31
      %p181 = scmp.lt.s32.totalorder %s21, 0
      %s182 = scalar_select %p181, %s21, 0
      %s183 = sadd.s32 %s182, %s180
      %s184 = smul.addr %s178, 32
      %s185 = sadd.s32 %s183, %s184
      %s186 = smul.addr %s185, 4
      %s187 = scalar_lea.vmem %s0, %s186
      %p188 = pneg %p58
      %p189 = pneg %p55
      %p190 = pneg %p79
      %p191 = pneg %p76
      %p192 = pneg %p100
      %p193 = pneg %p97
      %p194 = pneg %p128
      %p195 = pneg %p125
      %s196 = smul.u32 2, %s20
      %p197 = scmp.lt.s32.totalorder %s19, 1
      %s198 = scalar_select %p197, %s19, 1
      %p199 = scmp.lt.s32.totalorder %s196, 1
      %s200 = scalar_select %p199, %s196, 1
      %s201 = smul.addr %s198, 4
      %s202 = sadd.s32 %s200, %s201
      %s203 = smul.addr %s202, 4
      %s204 = scalar_lea.vmem %s3, %s203
      %s205 = smul.u32 32, %s20
      %p206 = scmp.lt.s32.totalorder %s19, 1
      %s207 = scalar_select %p206, %s19, 1
      %p208 = scmp.lt.s32.totalorder %s205, 31
      %s209 = scalar_select %p208, %s205, 31
      %p210 = scmp.lt.s32.totalorder %s21, 0
      %s211 = scalar_select %p210, %s21, 0
      %s212 = sadd.s32 %s211, %s209
      %s213 = smul.addr %s207, 32
      %s214 = sadd.s32 %s212, %s213
      %s215 = smul.addr %s214, 4
      %s216 = scalar_lea.vmem %s0, %s215
      %s217 = smul.u32 32, %s20
      %s218 = smul.u32 2, %s20
      %p219 = scmp.lt.s32.totalorder %s19, 1
      %s220 = scalar_select %p219, %s19, 1
      %p221 = scmp.lt.s32.totalorder %s218, 1
      %s222 = scalar_select %p221, %s218, 1
      %s223 = smul.addr %s220, 4
      %s224 = sadd.s32 %s222, %s223
      %s225 = smul.addr %s224, 4
      %s226 = scalar_lea.vmem %s3, %s225
      %s227 = smul.u32 2, %s20
      %p228 = scmp.eq.s32.totalorder %s21, 0
      // Predicated region
      $region33: #{conv2d_ibnorm_relu.3} parent=31 // pred_check
        %p229 = pneg %p228
      $region34: #{conv2d_ibnorm_relu.3} parent=31 // pred_check_branch
        %231 = sbr.rel (%p229) target = $region36
      $region35: #{conv2d_ibnorm_relu.3} parent=31 // pred_region
        %232 = vst [vmem:[#allocation2] sm:$0xff] 0.0
        %233 = vst [vmem:[#allocation2 + $0x8] sm:$0xff] 0.0
        %234 = vst [vmem:[#allocation2 + $0x10] sm:$0xff] 0.0
        %235 = vst [vmem:[#allocation2 + $0x18] sm:$0xff] 0.0
      $region36: #{conv2d_ibnorm_relu.3} parent=31 // pred_fallthru
        _
      %v236 = vld [vmem:[%s1] sm:$0xf]
      %v237 = vld [vmem:[%s1 + $0x4] sm:$0xf]
      %v238 = vld [vmem:[#allocation2] sm:$0xff]
      %v239 = vld [vmem:[#allocation2 + $0x8] sm:$0xff]
      %v240 = vld [vmem:[#allocation2 + $0x10] sm:$0xff]
      %v241 = vld [vmem:[#allocation2 + $0x18] sm:$0xff]
      %v242 = vld [vmem:[%s216] sm:$0xf]
      %v243 = vld [vmem:[%s216 + $0x4] sm:$0xf]
      %v244 = vld [vmem:[%s216 + $0x8] sm:$0xf]
      %v245 = vld [vmem:[%s216 + $0xc] sm:$0xf]
      %v246 = vld [vmem:[%s216 + $0x10] sm:$0xf]
      %v247 = vld [vmem:[%s216 + $0x14] sm:$0xf]
      %v248 = vld [vmem:[%s216 + $0x18] sm:$0xf]
      %v249 = vld [vmem:[%s216 + $0x1c] sm:$0xf]
      %v250 = vld [vmem:[%s216 + $0x20] sm:$0xf]
      %v251 = vld [vmem:[%s216 + $0x24] sm:$0xf]
      %v252 = vld [vmem:[%s216 + $0x28] sm:$0xf]
      %v253 = vld [vmem:[%s216 + $0x2c] sm:$0xf]
      %v254 = vld [vmem:[%s216 + $0x30] sm:$0xf]
      %v255 = vld [vmem:[%s216 + $0x34] sm:$0xf]
      %v256 = vld [vmem:[%s216 + $0x38] sm:$0xf]
      %v257 = vld [vmem:[%s216 + $0x3c] sm:$0xf]
      %v258 = vld [vmem:[%s216 + $0x40] sm:$0xf]
      %v259 = vld [vmem:[%s216 + $0x44] sm:$0xf]
      %v260 = vld [vmem:[%s216 + $0x48] sm:$0xf]
      %v261 = vld [vmem:[%s216 + $0x4c] sm:$0xf]
      %v262 = vld [vmem:[%s216 + $0x50] sm:$0xf]
      %v263 = vld [vmem:[%s216 + $0x54] sm:$0xf]
      %v264 = vld [vmem:[%s216 + $0x58] sm:$0xf]
      %v265 = vld [vmem:[%s216 + $0x5c] sm:$0xf]
      %v266 = vld [vmem:[%s216 + $0x60] sm:$0xf]
      %v267 = vld [vmem:[%s216 + $0x64] sm:$0xf]
      %v268 = vld [vmem:[%s216 + $0x68] sm:$0xf]
      %v269 = vld [vmem:[%s216 + $0x6c] sm:$0xf]
      %v270 = vld [vmem:[%s216 + $0x70] sm:$0xf]
      %v271 = vld [vmem:[%s216 + $0x74] sm:$0xf]
      %v272 = vld [vmem:[%s216 + $0x78] sm:$0xf]
      %v273 = vld [vmem:[%s216 + $0x7c] sm:$0xf]
      %v276 = vunpack.c.l.b16 %v236
      %v277 = vunpack.c.l.b16 %v237
      %v278 = vpack.c.b16 %v277, %v276
      %v312 = vunpack.c.l.b16 %v242
      %v313 = vunpack.c.l.b16 %v243
      %v314 = vunpack.c.l.b16 %v244
      %v315 = vunpack.c.l.b16 %v245
      %v316 = vunpack.c.l.b16 %v246
      %v317 = vunpack.c.l.b16 %v247
      %v318 = vunpack.c.l.b16 %v248
      %v319 = vunpack.c.l.b16 %v249
      %v320 = vunpack.c.l.b16 %v250
      %v321 = vunpack.c.l.b16 %v251
      %v322 = vunpack.c.l.b16 %v252
      %v323 = vunpack.c.l.b16 %v253
      %v324 = vunpack.c.l.b16 %v254
      %v325 = vunpack.c.l.b16 %v255
      %v326 = vunpack.c.l.b16 %v256
      %v327 = vunpack.c.l.b16 %v257
      %v328 = vunpack.c.l.b16 %v258
      %v329 = vunpack.c.l.b16 %v259
      %v330 = vunpack.c.l.b16 %v260
      %v331 = vunpack.c.l.b16 %v261
      %v332 = vunpack.c.l.b16 %v262
      %v333 = vunpack.c.l.b16 %v263
      %v334 = vunpack.c.l.b16 %v264
      %v335 = vunpack.c.l.b16 %v265
      %v336 = vunpack.c.l.b16 %v266
      %v337 = vunpack.c.l.b16 %v267
      %v338 = vunpack.c.l.b16 %v268
      %v339 = vunpack.c.l.b16 %v269
      %v340 = vunpack.c.l.b16 %v270
      %v341 = vunpack.c.l.b16 %v271
      %v342 = vunpack.c.l.b16 %v272
      %v343 = vunpack.c.l.b16 %v273
      %v344 = vpack.c.b16 %v313, %v312
      %v345 = vpack.c.b16 %v315, %v314
      %v346 = vpack.c.b16 %v317, %v316
      %v347 = vpack.c.b16 %v319, %v318
      %v348 = vpack.c.b16 %v321, %v320
      %v349 = vpack.c.b16 %v323, %v322
      %v350 = vpack.c.b16 %v325, %v324
      %v351 = vpack.c.b16 %v327, %v326
      %v352 = vpack.c.b16 %v329, %v328
      %v353 = vpack.c.b16 %v331, %v330
      %v354 = vpack.c.b16 %v333, %v332
      %v355 = vpack.c.b16 %v335, %v334
      %v356 = vpack.c.b16 %v337, %v336
      %v357 = vpack.c.b16 %v339, %v338
      %v358 = vpack.c.b16 %v341, %v340
      %v359 = vpack.c.b16 %v343, %v342
      %376 = vmatpush.bf16.xpose.msra.mxu0 %v351
      %377 = vmatpush.bf16.xpose.msra.mxu0 %v350
      %378 = vmatpush.bf16.xpose.msra.mxu0 %v349
      %379 = vmatpush.bf16.xpose.msra.mxu0 %v348
      %380 = vmatpush.bf16.xpose.msra.mxu0 %v347
      %381 = vmatpush.bf16.xpose.msra.mxu0 %v346
      %382 = vmatpush.bf16.xpose.msra.mxu0 %v345
      %383 = vmatpush.bf16.xpose.msra.mxu0 %v344
      %384 = vmatmul.bf16.gmra.mxu0 %v278
      %v385 = vpop.f32.mrf.mxu0
      %v386 = vadd.f32 0.0, %v385
      %v387 = vpop.f32.mrf.mxu0
      %v388 = vadd.f32 0.0, %v387
      %389 = vdwg.mxu0
      %390 = vmatpush.bf16.xpose.msra.mxu0 %v359
      %391 = vmatpush.bf16.xpose.msra.mxu0 %v358
      %392 = vmatpush.bf16.xpose.msra.mxu0 %v357
      %393 = vmatpush.bf16.xpose.msra.mxu0 %v356
      %394 = vmatpush.bf16.xpose.msra.mxu0 %v355
      %395 = vmatpush.bf16.xpose.msra.mxu0 %v354
      %396 = vmatpush.bf16.xpose.msra.mxu0 %v353
      %397 = vmatpush.bf16.xpose.msra.mxu0 %v352
      %398 = vmatmul.bf16.gmra.mxu0 %v278
      %v399 = vpop.f32.mrf.mxu0
      %v400 = vadd.f32 0.0, %v399
      %v401 = vpop.f32.mrf.mxu0
      %v402 = vadd.f32 0.0, %v401
      %403 = vdwg.mxu0
      %v404 = vadd.f32 %v238, %v386
      %v405 = vadd.f32 %v239, %v400
      %v406 = vadd.f32 %v240, %v388
      %v407 = vadd.f32 %v241, %v402
      %408 = vst [vmem:[#allocation2] sm:$0xff] %v404
      %409 = vst [vmem:[#allocation2 + $0x8] sm:$0xff] %v405
      %410 = vst [vmem:[#allocation2 + $0x10] sm:$0xff] %v406
      %411 = vst [vmem:[#allocation2 + $0x18] sm:$0xff] %v407
      // Predicated region
      $region37: #{conv2d_ibnorm_relu.3} parent=31 // pred_check
        %p412 = pneg %p228
      $region38: #{conv2d_ibnorm_relu.3} parent=31 // pred_check_branch
        %414 = sbr.rel (%p412) target = $region40
      $region39: #{conv2d_ibnorm_relu.3} parent=31 // pred_region
        %v415 = vld [vmem:[#allocation2] sm:$0xff]
        %v416 = vld [vmem:[#allocation2 + $0x8] sm:$0xff]
        %v417 = vld [vmem:[#allocation2 + $0x10] sm:$0xff]
        %v418 = vld [vmem:[#allocation2 + $0x18] sm:$0xff]
        %v419 = vld [vmem:[%s2] sm:$0xff]
        %v420 = vld [vmem:[%s2 + $0x8] sm:$0xff]
        %422 = vset.pattern.permute.xlu0 0
        %423 = vperm.xlu0 %422, %v419
        %v424 = vpop.permute.xlu0 %423
        %427 = vset.pattern.permute.xlu0 0
        %428 = vperm.xlu0 %427, %v420
        %v429 = vpop.permute.xlu0 %428
        %v431 = vadd.f32 %v415, %v424
        %v432 = vadd.f32 %v416, %v424
        %v433 = vadd.f32 %v417, %v429
        %v434 = vadd.f32 %v418, %v429
        %v435 = vpack.c.bf16 %v432, %v431
        %v436 = vpack.c.bf16 %v434, %v433
        %437 = vst [vmem:[%s226] sm:$0xff] %v435
        %438 = vst [vmem:[%s226 + $0x8] sm:$0xff] %v436
      $region40: #{conv2d_ibnorm_relu.3} parent=31 // pred_fallthru
        _
      %s439 = smul.u32 2, %s20
      %p440 = scmp.lt.s32.totalorder %s19, 1
      %s441 = scalar_select %p440, %s19, 1
      %p442 = scmp.lt.s32.totalorder %s439, 1
      %s443 = scalar_select %p442, %s439, 1
      %s444 = smul.addr %s441, 4
      %s445 = sadd.s32 %s443, %s444
      %s446 = smul.addr %s445, 4
      %s447 = scalar_lea.vmem %s3, %s446
      // Predicated region
      $region41: #{conv2d_ibnorm_relu.3} parent=31 // pred_check
        %p448 = pneg %p125
      $region42: #{conv2d_ibnorm_relu.3} parent=31 // pred_check_branch
        %450 = sbr.rel (%p448) target = $region44
      $region43: #{conv2d_ibnorm_relu.3} parent=31 // pred_region
        %s451 = smul.u32 2, %s20
      $region44: #{conv2d_ibnorm_relu.3} parent=31 // pred_fallthru
        _
    $region32: #{conv2d_ibnorm_relu.3} parent=5 // pred_fallthru
      _
    %p452 = scmp.le.s32.totalorder 2, %s9
    // Predicated region
    $region45: #{conv2d_ibnorm_relu.3} parent=5 // pred_check
      %p453 = pneg %p452
    $region46: #{conv2d_ibnorm_relu.3} parent=5 // pred_check_branch
      %455 = sbr.rel (%p453) target = $region48
    $region47: #{conv2d_ibnorm_relu.3} parent=5 // pred_region
      %s456 = ssub.s32 %s9, 2
      // Predicated region
      $region49: #{conv2d_ibnorm_relu.3} parent=47 // pred_check
        %p457 = pneg %p131
      $region50: #{conv2d_ibnorm_relu.3} parent=47 // pred_check_branch
        %459 = sbr.rel (%p457) target = $region52
      $region51: #{conv2d_ibnorm_relu.3} parent=47 // pred_region
        %s460 = smul.u32 2, %s23
        %p461 = scmp.lt.s32.totalorder %s22, 1
        %s462 = scalar_select %p461, %s22, 1
        %p463 = scmp.lt.s32.totalorder %s460, 1
        %s464 = scalar_select %p463, %s460, 1
        %s465 = smul.addr %s462, 4
        %s466 = sadd.s32 %s464, %s465
        %s467 = smul.addr %s466, 4
        %s468 = scalar_lea.vmem %s3, %s467
      $region52: #{conv2d_ibnorm_relu.3} parent=47 // pred_fallthru
        _
    $region48: #{conv2d_ibnorm_relu.3} parent=5 // pred_fallthru
      _
  $region6: #{conv2d_ibnorm_relu.3} parent=0 // loop_footer
    %s13 = sadd.s32 1, %s9
  $region7: #{conv2d_ibnorm_relu.3} parent=0 // loop_footer_branch
    %8 = sbr.rel target = $region3
  $region8: #{conv2d_ibnorm_relu.3} parent=0 // loop_exit
    _

// kernel: conv2d_ibnorm_relu.5
$region0: #{conv2d_ibnorm_relu.5}
  #allocation0 [shape = 'u32[]', space=smem, size = 0x4, offset = 0x4, fixed_abs, tag = 'smem constant byte address 0x4 - core index']
  #allocation1 [shape = 'u32[72,128]{1,0:T(1,128)}', space=vmem, size = 0x9000, scoped, tag = 'internal scratch']
  %s0 = inlined_call_operand.vmem [shape: bf16[2,16,256], index: 0, kind: input, shape index: {}]
  %s1 = inlined_call_operand.vmem [shape: f32[2,8,1], index: 1, kind: input, shape index: {}]
  %s2 = inlined_call_operand.vmem [shape: f32[2,8,1], index: 2, kind: input, shape index: {}]
  %s3 = inlined_call_operand.vmem [shape: f32[2,8,256], index: 3, kind: output, shape index: {}]
  %s4 = sld [smem:[#allocation0]]
  $region45: #{conv2d_ibnorm_relu.5} parent=0
    _
  %s6 = ssub.s32 1, %s4
  %s7 = scalar_select 0, %s6, %s4
  loop: start=0, step=1, limit=4
  $region2: #{conv2d_ibnorm_relu.5} parent=0 // loop_pre_header
    _
  $region3: #{conv2d_ibnorm_relu.5} parent=0 // loop_header
    %s9 = sphi 0, %s13
    %p10 = scmp.ge.s32.totalorder %s9, 4
    %s16 = sphi 0, %s28
    %s17 = sphi 0, %s24
    %s18 = sphi 0, %s16
    %s19 = sphi 0, %s17
    %s20 = sphi 0, %s18
    %s21 = sphi 0, %s19
    %s33 = sphi 0, %s35
    %s36 = sphi 0, %s33
    %s37 = sphi 0, %s36
    %s53 = sphi 0, %s37
    %s59 = sphi 0, %s61
    %s62 = sphi 0, %s59
    %s63 = sphi 0, %s62
    %s79 = sphi 0, %s63
    %s85 = sphi 0, %s87
    %s88 = sphi 0, %s85
    %s89 = sphi 0, %s88
    %s105 = sphi 0, %s89
    %s113 = sphi 0, %s115
    %s116 = sphi 0, %s113
    %s117 = sphi 0, %s116
    %s133 = sphi 0, %s117
  $region4: #{conv2d_ibnorm_relu.5} parent=0 // loop_header_branch
    %12 = sbr.rel (%p10) target = $region8
  $region5: #{conv2d_ibnorm_relu.5} parent=0 // loop_body
    %s14 = ssub.s32 %s9, 1
    %s15 = ssub.s32 %s9, 2
    %s22 = sadd.s32 1, %s17
    %p23 = scmp.ge.s32.totalorder %s22, 1
    %s24 = scalar_select %p23, 0, %s22
    %s25 = sadd.s32 1, %s16
    %s26 = scalar_select %p23, %s25, %s16
    %p27 = scmp.ge.s32.totalorder %s26, 2
    %s28 = scalar_select %p27, 0, %s26
    %s29 = ssub.s32 %s16, %s28
    %s30 = ssub.s32 %s17, %s24
    %s31 = sor.u32 %s29, %s30
    %p32 = scmp.eq.s32.totalorder %s31, 0
    %s34 = sadd.s32 %s33, 1
    %s35 = scalar_select %p32, %s33, %s34
    %p38 = pneg %p32
    %p39 = scmp.eq.s32.totalorder %s9, 1
    %p40 = por %p38, %p39
    %p41 = scmp.ne.s32.totalorder %s33, %s36
    %p42 = scmp.eq.s32.totalorder %s9, 0
    %p43 = por %p41, %p42
    %p44 = scmp.ne.s32.totalorder %s33, %s36
    %p45 = scmp.eq.s32.totalorder %s14, 1
    %p46 = por %p44, %p45
    %p47 = scmp.ne.s32.totalorder %s36, %s37
    %p48 = scmp.eq.s32.totalorder %s14, 0
    %p49 = por %p47, %p48
    %p50 = scmp.ne.s32.totalorder %s36, %s37
    %p51 = scmp.eq.s32.totalorder %s15, 1
    %p52 = por %p50, %p51
    %p54 = scmp.ne.s32.totalorder %s37, %s53
    %p55 = scmp.eq.s32.totalorder %s15, 0
    %p56 = por %p54, %p55
    %s57 = ssub.s32 %s16, %s28
    %p58 = scmp.eq.s32.totalorder %s57, 0
    %s60 = sadd.s32 %s59, 1
    %s61 = scalar_select %p58, %s59, %s60
    %p64 = pneg %p58
    %p65 = scmp.eq.s32.totalorder %s9, 1
    %p66 = por %p64, %p65
    %p67 = scmp.ne.s32.totalorder %s59, %s62
    %p68 = scmp.eq.s32.totalorder %s9, 0
    %p69 = por %p67, %p68
    %p70 = scmp.ne.s32.totalorder %s59, %s62
    %p71 = scmp.eq.s32.totalorder %s14, 1
    %p72 = por %p70, %p71
    %p73 = scmp.ne.s32.totalorder %s62, %s63
    %p74 = scmp.eq.s32.totalorder %s14, 0
    %p75 = por %p73, %p74
    %p76 = scmp.ne.s32.totalorder %s62, %s63
    %p77 = scmp.eq.s32.totalorder %s15, 1
    %p78 = por %p76, %p77
    %p80 = scmp.ne.s32.totalorder %s63, %s79
    %p81 = scmp.eq.s32.totalorder %s15, 0
    %p82 = por %p80, %p81
    %s83 = ssub.s32 %s16, %s28
    %p84 = scmp.eq.s32.totalorder %s83, 0
    %s86 = sadd.s32 %s85, 1
    %s87 = scalar_select %p84, %s85, %s86
    %p90 = pneg %p84
    %p91 = scmp.eq.s32.totalorder %s9, 1
    %p92 = por %p90, %p91
    %p93 = scmp.ne.s32.totalorder %s85, %s88
    %p94 = scmp.eq.s32.totalorder %s9, 0
    %p95 = por %p93, %p94
    %p96 = scmp.ne.s32.totalorder %s85, %s88
    %p97 = scmp.eq.s32.totalorder %s14, 1
    %p98 = por %p96, %p97
    %p99 = scmp.ne.s32.totalorder %s88, %s89
    %p100 = scmp.eq.s32.totalorder %s14, 0
    %p101 = por %p99, %p100
    %p102 = scmp.ne.s32.totalorder %s88, %s89
    %p103 = scmp.eq.s32.totalorder %s15, 1
    %p104 = por %p102, %p103
    %p106 = scmp.ne.s32.totalorder %s89, %s105
    %p107 = scmp.eq.s32.totalorder %s15, 0
    %p108 = por %p106, %p107
    %s109 = ssub.s32 %s16, %s28
    %s110 = ssub.s32 %s17, %s24
    %s111 = sor.u32 %s109, %s110
    %p112 = scmp.eq.s32.totalorder %s111, 0
    %s114 = sadd.s32 %s113, 1
    %s115 = scalar_select %p112, %s113, %s114
    %p118 = pneg %p112
    %p119 = scmp.eq.s32.totalorder %s9, 1
    %p120 = por %p118, %p119
    %p121 = scmp.ne.s32.totalorder %s113, %s116
    %p122 = scmp.eq.s32.totalorder %s9, 0
    %p123 = por %p121, %p122
    %p124 = scmp.ne.s32.totalorder %s113, %s116
    %p125 = scmp.eq.s32.totalorder %s14, 1
    %p126 = por %p124, %p125
    %p127 = scmp.ne.s32.totalorder %s116, %s117
    %p128 = scmp.eq.s32.totalorder %s14, 0
    %p129 = por %p127, %p128
    %p130 = scmp.ne.s32.totalorder %s116, %s117
    %p131 = scmp.eq.s32.totalorder %s15, 1
    %p132 = por %p130, %p131
    %p134 = scmp.ne.s32.totalorder %s117, %s133
    %p135 = scmp.eq.s32.totalorder %s15, 0
    %p136 = por %p134, %p135
    %p137 = scmp.le.s32.totalorder 1, %s9
    %p138 = scmp.lt.s32.totalorder %s9, 3
    %p139 = pnand %p137, %p138
    %p140 = pneg %p139
    // Predicated region
    $region9: #{conv2d_ibnorm_relu.5} parent=5 // pred_check
      _
    $region10: #{conv2d_ibnorm_relu.5} parent=5 // pred_check_branch
      %142 = sbr.rel (%p139) target = $region12
    $region11: #{conv2d_ibnorm_relu.5} parent=5 // pred_region
      %s143 = ssub.s32 %s9, 1
    $region12: #{conv2d_ibnorm_relu.5} parent=5 // pred_fallthru
      _
    %p144 = scmp.lt.s32.totalorder %s9, 2
    // Predicated region
    $region13: #{conv2d_ibnorm_relu.5} parent=5 // pred_check
      %p145 = pneg %p144
    $region14: #{conv2d_ibnorm_relu.5} parent=5 // pred_check_branch
      %147 = sbr.rel (%p145) target = $region16
    $region15: #{conv2d_ibnorm_relu.5} parent=5 // pred_region
      // Predicated region
      $region17: #{conv2d_ibnorm_relu.5} parent=15 // pred_check
        %p148 = pneg %p43
      $region18: #{conv2d_ibnorm_relu.5} parent=15 // pred_check_branch
        %150 = sbr.rel (%p148) target = $region20
      $region19: #{conv2d_ibnorm_relu.5} parent=15 // pred_region
        %s151 = smul.u32 2, %s17
        %p152 = scmp.lt.s32.totalorder %s16, 1
        %s153 = scalar_select %p152, %s16, 1
        %p154 = scmp.lt.s32.totalorder %s151, 1
        %s155 = scalar_select %p154, %s151, 1
        %s156 = smul.addr %s153, 4
        %s157 = sadd.s32 %s155, %s156
        %s158 = smul.addr %s157, 4
        %s159 = scalar_lea.vmem %s0, %s158
        %s160 = smul.u32 2, %s17
      $region20: #{conv2d_ibnorm_relu.5} parent=15 // pred_fallthru
        _
      // Predicated region
      $region21: #{conv2d_ibnorm_relu.5} parent=15 // pred_check
        %p161 = pneg %p69
      $region22: #{conv2d_ibnorm_relu.5} parent=15 // pred_check_branch
        %163 = sbr.rel (%p161) target = $region24
      $region23: #{conv2d_ibnorm_relu.5} parent=15 // pred_region
        %p164 = scmp.lt.s32.totalorder %s16, 1
        %s165 = scalar_select %p164, %s16, 1
        %s166 = smul.addr %s165, 8
        %s167 = scalar_lea.vmem %s1, %s166
      $region24: #{conv2d_ibnorm_relu.5} parent=15 // pred_fallthru
        _
      // Predicated region
      $region25: #{conv2d_ibnorm_relu.5} parent=15 // pred_check
        %p168 = pneg %p95
      $region26: #{conv2d_ibnorm_relu.5} parent=15 // pred_check_branch
        %170 = sbr.rel (%p168) target = $region28
      $region27: #{conv2d_ibnorm_relu.5} parent=15 // pred_region
        %p171 = scmp.lt.s32.totalorder %s16, 1
        %s172 = scalar_select %p171, %s16, 1
        %s173 = smul.addr %s172, 8
        %s174 = scalar_lea.vmem %s2, %s173
      $region28: #{conv2d_ibnorm_relu.5} parent=15 // pred_fallthru
        _
    $region16: #{conv2d_ibnorm_relu.5} parent=5 // pred_fallthru
      _
    %p175 = scmp.le.s32.totalorder 1, %s9
    %p176 = scmp.lt.s32.totalorder %s9, 3
    %p177 = pnand %p175, %p176
    %p178 = pneg %p177
    // Predicated region
    $region29: #{conv2d_ibnorm_relu.5} parent=5 // pred_check
      _
    $region30: #{conv2d_ibnorm_relu.5} parent=5 // pred_check_branch
      %180 = sbr.rel (%p177) target = $region32
    $region31: #{conv2d_ibnorm_relu.5} parent=5 // pred_region
      %s181 = ssub.s32 %s9, 1
      %s182 = smul.u32 2, %s19
      %p183 = scmp.lt.s32.totalorder %s18, 1
      %s184 = scalar_select %p183, %s18, 1
      %p185 = scmp.lt.s32.totalorder %s182, 1
      %s186 = scalar_select %p185, %s182, 1
      %s187 = smul.addr %s184, 4
      %s188 = sadd.s32 %s186, %s187
      %s189 = smul.addr %s188, 4
      %s190 = scalar_lea.vmem %s0, %s189
      %p191 = pneg %p49
      %p192 = pneg %p46
      %p193 = scmp.lt.s32.totalorder %s18, 1
      %s194 = scalar_select %p193, %s18, 1
      %s195 = smul.addr %s194, 8
      %s196 = scalar_lea.vmem %s1, %s195
      %p197 = pneg %p75
      %p198 = pneg %p72
      %p199 = scmp.lt.s32.totalorder %s18, 1
      %s200 = scalar_select %p199, %s18, 1
      %s201 = smul.addr %s200, 8
      %s202 = scalar_lea.vmem %s2, %s201
      %p203 = pneg %p101
      %p204 = pneg %p98
      %p205 = pneg %p129
      %p206 = pneg %p126
      %s207 = smul.u32 2, %s19
      %p208 = scmp.lt.s32.totalorder %s18, 1
      %s209 = scalar_select %p208, %s18, 1
      %p210 = scmp.lt.s32.totalorder %s207, 1
      %s211 = scalar_select %p210, %s207, 1
      %s212 = smul.addr %s209, 2
      %s213 = sadd.s32 %s211, %s212
      %s214 = smul.addr %s213, 8
      %s215 = scalar_lea.vmem %s3, %s214
      %s216 = smul.u32 2, %s19
      %p217 = scmp.lt.s32.totalorder %s18, 1
      %s218 = scalar_select %p217, %s18, 1
      %p219 = scmp.lt.s32.totalorder %s216, 1
      %s220 = scalar_select %p219, %s216, 1
      %s221 = smul.addr %s218, 4
      %s222 = sadd.s32 %s220, %s221
      %s223 = smul.addr %s222, 4
      %s224 = scalar_lea.vmem %s0, %s223
      %s225 = smul.u32 2, %s19
      %p226 = scmp.lt.s32.totalorder %s18, 1
      %s227 = scalar_select %p226, %s18, 1
      %s228 = smul.addr %s227, 8
      %s229 = scalar_lea.vmem %s1, %s228
      %p230 = scmp.lt.s32.totalorder %s18, 1
      %s231 = scalar_select %p230, %s18, 1
      %s232 = smul.addr %s231, 8
      %s233 = scalar_lea.vmem %s2, %s232
      %s234 = smul.u32 2, %s19
      %p235 = scmp.lt.s32.totalorder %s18, 1
      %s236 = scalar_select %p235, %s18, 1
      %p237 = scmp.lt.s32.totalorder %s234, 1
      %s238 = scalar_select %p237, %s234, 1
      %s239 = smul.addr %s236, 2
      %s240 = sadd.s32 %s238, %s239
      %s241 = smul.addr %s240, 8
      %s242 = scalar_lea.vmem %s3, %s241
      %s243 = smul.u32 2, %s19
      %v244 = vld [vmem:[%s224] sm:$0xff]
      %v245 = vunpack.c.l.bf16 %v244
      %v246 = vunpack.c.h.bf16 %v244
      %v247 = vld [vmem:[%s229] sm:$0xff]
      %249 = vset.pattern.permute.xlu0 0
      %250 = vperm.xlu0 %249, %v247
      %v251 = vpop.permute.xlu0 %250
      %v253 = vmul.f32 %v245, %v251
      %v254 = vmul.f32 %v246, %v251
      %v255 = vld [vmem:[%s233] sm:$0xff]
      %257 = vset.pattern.permute.xlu0 0
      %258 = vperm.xlu0 %257, %v255
      %v259 = vpop.permute.xlu0 %258
      %v261 = vadd.f32 %v253, %v259
      %v262 = vadd.f32 %v254, %v259
      %v263 = vmax.f32 %v261, 0.0
      %v264 = vmax.f32 %v262, 0.0
      %265 = vst [vmem:[%s242] sm:$0xff] %v263
      %266 = vst [vmem:[%s242 + $0x8] sm:$0xff] %v264
      %s267 = smul.u32 2, %s19
      %p268 = scmp.lt.s32.totalorder %s18, 1
      %s269 = scalar_select %p268, %s18, 1
      %p270 = scmp.lt.s32.totalorder %s267, 1
      %s271 = scalar_select %p270, %s267, 1
      %s272 = smul.addr %s269, 2
      %s273 = sadd.s32 %s271, %s272
      %s274 = smul.addr %s273, 8
      %s275 = scalar_lea.vmem %s3, %s274
      // Predicated region
      $region33: #{conv2d_ibnorm_relu.5} parent=31 // pred_check
        %p276 = pneg %p126
      $region34: #{conv2d_ibnorm_relu.5} parent=31 // pred_check_branch
        %278 = sbr.rel (%p276) target = $region36
      $region35: #{conv2d_ibnorm_relu.5} parent=31 // pred_region
        %s279 = smul.u32 2, %s19
      $region36: #{conv2d_ibnorm_relu.5} parent=31 // pred_fallthru
        _
    $region32: #{conv2d_ibnorm_relu.5} parent=5 // pred_fallthru
      _
    %p280 = scmp.le.s32.totalorder 2, %s9
    // Predicated region
    $region37: #{conv2d_ibnorm_relu.5} parent=5 // pred_check
      %p281 = pneg %p280
    $region38: #{conv2d_ibnorm_relu.5} parent=5 // pred_check_branch
      %283 = sbr.rel (%p281) target = $region40
    $region39: #{conv2d_ibnorm_relu.5} parent=5 // pred_region
      %s284 = ssub.s32 %s9, 2
      // Predicated region
      $region41: #{conv2d_ibnorm_relu.5} parent=39 // pred_check
        %p285 = pneg %p132
      $region42: #{conv2d_ibnorm_relu.5} parent=39 // pred_check_branch
        %287 = sbr.rel (%p285) target = $region44
      $region43: #{conv2d_ibnorm_relu.5} parent=39 // pred_region
        %s288 = smul.u32 2, %s21
        %p289 = scmp.lt.s32.totalorder %s20, 1
        %s290 = scalar_select %p289, %s20, 1
        %p291 = scmp.lt.s32.totalorder %s288, 1
        %s292 = scalar_select %p291, %s288, 1
        %s293 = smul.addr %s290, 2
        %s294 = sadd.s32 %s292, %s293
        %s295 = smul.addr %s294, 8
        %s296 = scalar_lea.vmem %s3, %s295
      $region44: #{conv2d_ibnorm_relu.5} parent=39 // pred_fallthru
        _
    $region40: #{conv2d_ibnorm_relu.5} parent=5 // pred_fallthru
      _
  $region6: #{conv2d_ibnorm_relu.5} parent=0 // loop_footer
    %s13 = sadd.s32 1, %s9
  $region7: #{conv2d_ibnorm_relu.5} parent=0 // loop_footer_branch
    %8 = sbr.rel target = $region3
  $region8: #{conv2d_ibnorm_relu.5} parent=0 // loop_exit
    _

</llo_original>
